<compile_context>
chip_gen: v6e
topology: v6e:2x2x1
jax: 0.10.0
libtpu: 0.0.40
codegen_flags: <defaults>
</compile_context>

<pallas_src>
import functools

import jax
import jax.numpy as jnp
from jax import lax
from jax.experimental import pallas as pl
from jax.experimental.pallas import tpu as pltpu


def proj_kernel(h_ref, w_ref, hp_ref):
    """Linear projection hp = h @ W (PyG GATConv lin has no bias)."""
    hp_ref[...] = jnp.dot(h_ref[...].astype(jnp.bfloat16),
                          w_ref[...].astype(jnp.bfloat16),
                          preferred_element_type=jnp.float32)


def gat_aggregate_kernel(hp_ref, adj_ref, a_src_ref, a_dst_ref, b_ref, out_ref,
                         *, tm, apply_relu):
    """Attention softmax + aggregation for one tile of destination rows."""
    NEG = jnp.float32(-1e30)
    row0 = pl.multiple_of(pl.program_id(0) * tm, tm)

    hp_all = hp_ref[...]                                    # (Np, C) f32, resident
    hp_dst = hp_ref[pl.ds(row0, tm), :]                     # (tm, C)

    # logits[d, s] = <hp_dst[d], a_dst> + <hp_all[s], a_src>
    d_col = lax.dot_general(hp_dst, a_dst_ref[...], (((1,), (1,)), ((), ())),
                            preferred_element_type=jnp.float32)   # (tm, 1)
    s_row = lax.dot_general(a_src_ref[...], hp_all, (((1,), (1,)), ((), ())),
                            preferred_element_type=jnp.float32)   # (1, Np)
    logits = d_col + s_row                                         # (tm, Np)
    logits = jnp.where(logits > 0, logits, 0.2 * logits)           # leaky_relu(0.2)
    logits = jnp.where(adj_ref[...] > 0, logits, NEG)              # real edges only

    # softmax over sources per destination row (f32 on the VPU).  No second
    # mask: masked logits are -1e30 and every row has a self loop (finite max),
    # so exp(logit - m) is exactly 0 on non-edges.
    m = jnp.max(logits, axis=1, keepdims=True)
    e = jnp.exp(logits - m)
    p = e * pl.reciprocal(jnp.sum(e, axis=1, keepdims=True), approx=True)

    out = jnp.dot(p.astype(jnp.bfloat16), hp_all.astype(jnp.bfloat16),
                  preferred_element_type=jnp.float32) + b_ref[...]  # (tm, C)
    if apply_relu:
        out = jnp.maximum(out, 0.0)                                 # fused F.relu
    out_ref[...] = out


def _round_up(x, m):
    return ((x + m - 1) // m) * m


def _tiles(n):
    """Destination-row tile size and padded node count."""
    if n <= 512:                       # single tile: block == full array (always legal)
        np_ = _round_up(max(n, 8), 8)
        return np_, np_
    return 128, _round_up(n, 128)


def _project(h, w, *, tm):
    Np, F = h.shape
    C = w.shape[1]
    return pl.pallas_call(
        proj_kernel,
        out_shape=jax.ShapeDtypeStruct((Np, C), jnp.float32),
        grid_spec=pltpu.PrefetchScalarGridSpec(
            num_scalar_prefetch=0,
            grid=(Np // tm,),
            in_specs=[pl.BlockSpec((tm, F), lambda i: (i, 0)),   # node-row tile
                      pl.BlockSpec((F, C), lambda i: (0, 0))],   # weights resident
            out_specs=pl.BlockSpec((tm, C), lambda i: (i, 0)),
        ),
        compiler_params=pltpu.CompilerParams(
            dimension_semantics=("parallel",)),
    )(h, w)


def _aggregate(hp, adj, a_src, a_dst, b, *, tm, apply_relu):
    Np, C = hp.shape
    assert adj.shape == (Np, Np) and Np % tm == 0

    # Crude VMEM budget: resident hp + double-buffered tiles + in-kernel temps.
    est = (2 * Np * C * 4                     # hp resident (allow double buffer)
           + 2 * tm * Np * 2                  # adj row tiles (bf16, double buffered)
           + 2 * tm * C * 4                   # output tiles
           + 3 * tm * Np * 4                  # logits / e / p temps
           + 2 * tm * C * 4 + 6 * C * 4)      # hp_dst, out, small vectors
    vmem_limit = int(min(max(2 * est, 16 << 20), 48 << 20))   # stay under v7x 64 MiB

    return pl.pallas_call(
        functools.partial(gat_aggregate_kernel, tm=tm, apply_relu=apply_relu),
        out_shape=jax.ShapeDtypeStruct((Np, C), jnp.float32),
        grid_spec=pltpu.PrefetchScalarGridSpec(
            num_scalar_prefetch=0,
            grid=(Np // tm,),
            in_specs=[
                pl.BlockSpec((Np, C), lambda i: (0, 0)),    # hp: all sources (resident)
                pl.BlockSpec((tm, Np), lambda i: (i, 0)),   # adj row tile (bf16)
                pl.BlockSpec((1, C), lambda i: (0, 0)),     # a_src
                pl.BlockSpec((1, C), lambda i: (0, 0)),     # a_dst
                pl.BlockSpec((1, C), lambda i: (0, 0)),     # bias
            ],
            out_specs=pl.BlockSpec((tm, C), lambda i: (i, 0)),
        ),
        compiler_params=pltpu.CompilerParams(
            dimension_semantics=("parallel",),
            vmem_limit_bytes=vmem_limit,
        ),
    )(hp, adj, a_src, a_dst, b)


def _gat_conv(h, adj, w, a_src, a_dst, b, *, tm, apply_relu):
    hp = _project(h, w, tm=tm)
    return _aggregate(hp, adj, a_src, a_dst, b, tm=tm, apply_relu=apply_relu)


def init_params(key, in_dim, h_dim, out_dim):
    ks = jax.random.split(key, 6)

    def glorot(k, shape):
        limit = (6.0 / (shape[0] + shape[1])) ** 0.5
        return jax.random.uniform(k, shape, jnp.float32, -limit, limit)

    return dict(
        w1=glorot(ks[0], (in_dim, h_dim)),
        a1_src=glorot(ks[1], (1, h_dim)),
        a1_dst=glorot(ks[2], (1, h_dim)),
        b1=jnp.zeros((1, h_dim), jnp.float32),
        w2=glorot(ks[3], (h_dim, out_dim)),
        a2_src=glorot(ks[4], (1, out_dim)),
        a2_dst=glorot(ks[5], (1, out_dim)),
        b2=jnp.zeros((1, out_dim), jnp.float32),
    )


def mask_encoder_forward(x, edge_index, params):
    N, F = x.shape
    E = edge_index.shape[1]
    src, dst = edge_index[0], edge_index[1]

    tm, Np = _tiles(N)

    # Dense adjacency with self loops (PyG GATConv add_self_loops=True); padded
    # rows also get a self loop so their softmax stays well defined.  bf16 0/1
    # mask halves the N^2 DMA / VMEM footprint with zero numerical effect.
    adj = jnp.zeros((Np, Np), jnp.float32)
    adj = adj.at[dst, src].set(1.0)
    adj = adj.at[jnp.arange(Np), jnp.arange(Np)].set(1.0)
    adj = adj.astype(jnp.bfloat16)

    x_p = jnp.zeros((Np, F), jnp.float32).at[:N].set(x)

    h1 = _gat_conv(x_p, adj, params['w1'], params['a1_src'], params['a1_dst'],
                   params['b1'], tm=tm, apply_relu=True)
    # TODO(synk): training-mode F.dropout(p=0.5) (torch RNG) — identity in eval.
    h2 = _gat_conv(h1, adj, params['w2'], params['a2_src'], params['a2_dst'],
                   params['b2'], tm=tm, apply_relu=False)
    h2 = h2[:N]

    # Per-edge score + top-k in plain JAX (no one-hot gather matmuls needed).
    value = jnp.sum(h2[src] * h2[dst], axis=1)
    k_homo = int(E * 0.95)
    k_het = int(E * 0.05)
    _, topk_homo = lax.top_k(value, k_homo)
    _, topk_het = lax.top_k(-value, k_het)
    return edge_index[:, topk_homo], edge_index[:, topk_het]


if __name__ == "__main__":
    key = jax.random.PRNGKey(0)
    N, in_dim, h_dim, out_dim = 16, 8, 32, 16
    kx, kp = jax.random.split(key)

    x = jax.random.normal(kx, (N, in_dim), jnp.float32)

    # deterministic directed graph: no duplicates, no self loops, E = 40
    src_list, dst_list = [], []
    for i in range(N):
        for off in (1, 3):
            src_list.append(i)
            dst_list.append((i + off) % N)
    for i in range(8):
        src_list.append(i)
        dst_list.append((i + 5) % N)
    edge_index = jnp.array([src_list, dst_list], dtype=jnp.int32)   # (2, 40)

    params = init_params(kp, in_dim, h_dim, out_dim)

    homo_edges, hetero_edges = mask_encoder_forward(x, edge_index, params)
    jax.block_until_ready((homo_edges, hetero_edges))
    assert homo_edges.shape == (2, int(40 * 0.95))
    assert hetero_edges.shape == (2, int(40 * 0.05))
    print("KERNEL_OK")
</pallas_src>

<mosaic_0001>
module attributes {stable_mosaic.version = 11 : i64} {
  func.func @proj_kernel(%arg0: i32, %arg1: memref<16x8xf32, #tpu.memory_space<vmem>>, %arg2: memref<8x32xf32, #tpu.memory_space<vmem>>, %arg3: memref<16x32xf32, #tpu.memory_space<vmem>>) attributes {dimension_semantics = [#tpu.dimension_semantics<parallel>], iteration_bounds = array<i64: 1>, scalar_prefetch = 0 : i64, scratch_operands = 0 : i64, tpu.core_type = #tpu.core_type<tc>, window_params = [{transform_indices = @transform_0, window_bounds = array<i64: 16, 8>}, {pipeline_mode = #tpu.pipeline_mode<synchronous>, transform_indices = @transform_1, window_bounds = array<i64: 8, 32>}, {transform_indices = @transform_2, window_bounds = array<i64: 16, 32>}]} {
    %c0 = arith.constant 0 : index
    %c0_0 = arith.constant 0 : index
    %0 = vector.load %arg1[%c0, %c0_0] : memref<16x8xf32, #tpu.memory_space<vmem>>, vector<16x8xf32>
    %1 = arith.truncf %0 : vector<16x8xf32> to vector<16x8xbf16>
    %c0_1 = arith.constant 0 : index
    %c0_2 = arith.constant 0 : index
    %2 = vector.load %arg2[%c0_1, %c0_2] : memref<8x32xf32, #tpu.memory_space<vmem>>, vector<8x32xf32>
    %3 = arith.truncf %2 : vector<8x32xf32> to vector<8x32xbf16>
    %cst = arith.constant dense<0.000000e+00> : vector<16x32xf32>
    %4 = tpu.matmul %1, %3, %cst {dimension_numbers = #tpu.dot_dimension_numbers<[1], [0], [0], [1], [0, 0, 1, 1], [], []>} : vector<16x8xbf16>, vector<8x32xbf16>, vector<16x32xf32> -> vector<16x32xf32>
    %c0_3 = arith.constant 0 : index
    %c0_4 = arith.constant 0 : index
    %5 = vector.load %arg3[%c0_3, %c0_4] : memref<16x32xf32, #tpu.memory_space<vmem>>, vector<16x32xf32>
    tpu.vector_store %arg3[%c0_3, %c0_4], %4 {strides = array<i32>} : memref<16x32xf32, #tpu.memory_space<vmem>>, vector<16x32xf32>,
    return
  }
  func.func @transform_0(%arg0: i32) -> (i32, i32) {
    %c0_i32 = arith.constant 0 : i32
    %c0_i32_0 = arith.constant 0 : i32
    return %arg0, %c0_i32 : i32, i32
  }
  func.func @transform_1(%arg0: i32) -> (i32, i32) {
    %c0_i32 = arith.constant 0 : i32
    %c0_i32_0 = arith.constant 0 : i32
    %c0_i32_1 = arith.constant 0 : i32
    return %c0_i32, %c0_i32_0 : i32, i32
  }
  func.func @transform_2(%arg0: i32) -> (i32, i32) {
    %c0_i32 = arith.constant 0 : i32
    %c0_i32_0 = arith.constant 0 : i32
    return %arg0, %c0_i32 : i32, i32
  }
}

</mosaic_0001>

<llo_original>
// kernel: tpu_custom_call.1
$region0: #{tpu_custom_call.1}
  #allocation0 [shape = 'u32[]', space=smem, size = 0x4, offset = 0x4, fixed_abs, tag = 'smem constant byte address 0x4 - core index']
  #allocation1 [shape = 'u32[144,128]{1,0:T(1,128)}', space=vmem, size = 0x12000, scoped, tag = 'internal scratch']
  %s0 = inlined_call_operand.vmem [shape: f32[16,8], index: 0, kind: input, shape index: {}]
  %s1 = inlined_call_operand.vmem [shape: f32[8,32], index: 1, kind: input, shape index: {}]
  %s2 = inlined_call_operand.hbm [shape: f32[16,32], index: 2, kind: output, shape index: {}]
  %s3 = sld [smem:[#allocation0]]
  $region18: #{tpu_custom_call.1} parent=0
    _
  %s5 = ssub.s32 1, %s3
  %s6 = scalar_select 0, %s5, %s3
  $region1: #{tpu_custom_call.1} parent=0
    #allocation2 [shape = 'u8[8192]{0}', space=vmem, size = 0x2000, scoped, tag = 'output window, operand 0, single buffered']
    #allocation3 [shape = 's32[1]{0}', space=sflag, size = 0x4, scoped, tag = 'scoped memory for tpu_custom_call.1']
    %7 = vsyncpa [#allocation3], 0
    // Predicated region
    $region2: #{tpu_custom_call.1} parent=1 // pred_check
      _
    $region3: #{tpu_custom_call.1} parent=1 // pred_check_branch
      %9 = sbr.rel (0) target = $region5
    $region4: #{tpu_custom_call.1} parent=1 // pred_region
      _
    $region5: #{tpu_custom_call.1} parent=1 // pred_fallthru
      _
    // Predicated region
    $region6: #{tpu_custom_call.1} parent=1 // pred_check
      _
    $region7: #{tpu_custom_call.1} parent=1 // pred_check_branch
      %11 = sbr.rel (0) target = $region9
    $region8: #{tpu_custom_call.1} parent=1 // pred_region
      _
    $region9: #{tpu_custom_call.1} parent=1 // pred_fallthru
      _
    %v13 = vld [vmem:[%s0] sm:$0xff]
    %v14 = vld [vmem:[%s0 + $0x8] sm:$0xff]
    %v15 = vpack.c.bf16 %v14, %v13
    %v16 = vld [vmem:[%s1] sm:$0xff]
    %v17 = vpack.c.bf16 %v16, %v16
    %vm18 = vcmask 64512
    %v20 = vsel %vm18, %v15, 0
    %vm22 = vcmask 1043456
    %v24 = vsel %vm22, %v17, 0
    %26 = vmatprep.subr.bf16.mxu0 0
    %27 = vmatpush1.bf16.msra.mxu0 0
    %28 = vmatprep.subr.bf16.mxu0 0
    %29 = vmatpush1.bf16.msra.mxu0 0
    %30 = vmatprep.subr.bf16.mxu0 0
    %31 = vmatpush1.bf16.msra.mxu0 0
    %32 = vmatprep.subr.bf16.mxu0 0
    %33 = vmatpush1.bf16.msra.mxu0 0
    %34 = vmatprep.subr.bf16.mxu0 0
    %35 = vmatpush1.bf16.msra.mxu0 0
    %36 = vmatprep.subr.bf16.mxu0 0
    %37 = vmatpush1.bf16.msra.mxu0 0
    %38 = vmatprep.subr.bf16.mxu0 0
    %39 = vmatpush1.bf16.msra.mxu0 0
    %40 = vmatprep.subr.bf16.mxu0 0
    %41 = vmatpush1.bf16.msra.mxu0 %v24
    %42 = vmatprep.subr.bf16.mxu0 0
    %43 = vmatpush2.bf16.msra.mxu0 0
    %44 = vmatprep.subr.bf16.mxu0 0
    %45 = vmatpush2.bf16.msra.mxu0 0
    %46 = vmatprep.subr.bf16.mxu0 0
    %47 = vmatpush2.bf16.msra.mxu0 0
    %48 = vmatprep.subr.bf16.mxu0 0
    %49 = vmatpush2.bf16.msra.mxu0 0
    %50 = vmatprep.subr.bf16.mxu0 0
    %51 = vmatpush2.bf16.msra.mxu0 0
    %52 = vmatprep.subr.bf16.mxu0 0
    %53 = vmatpush2.bf16.msra.mxu0 0
    %54 = vmatprep.subr.bf16.mxu0 0
    %55 = vmatpush2.bf16.msra.mxu0 0
    %56 = vmatprep.subr.bf16.mxu0 0
    %57 = vmatpush2.bf16.msra.mxu0 0
    %58 = vmatprep.mubr.bf16.mxu0 0
    %59 = vmatmul.mubr.bf16.gmra.mxu0 %v20
    %v60 = vpop.f32.mrf.mxu0
    %v61 = vadd.f32 0.0, %v60
    %v62 = vpop.f32.mrf.mxu0
    %v63 = vpop.f32.mrf.mxu0
    %v64 = vadd.f32 0.0, %v63
    %v65 = vpop.f32.mrf.mxu0
    %66 = vdwg.mxu0
    %vm67 = vcmask 261120
    %68 = vst.msk [vmem:[#allocation2] sm:$0xff] %vm67, %v61
    %69 = vst.msk [vmem:[#allocation2 + $0x8] sm:$0xff] %vm67, %v64
    // Predicated region
    $region10: #{tpu_custom_call.1} parent=1 // pred_check
      _
    $region11: #{tpu_custom_call.1} parent=1 // pred_check_branch
      %71 = sbr.rel (0) target = $region13
    $region12: #{tpu_custom_call.1} parent=1 // pred_region
      %s73 = ssub.s32 256, 256
      %74 = vsyncadd [#allocation3], %s73
      %s75 = sshll.u32 [#allocation2], 4
      %s76 = int_to_ptr.vmem [resolvable:$true] %s75
      %81 = dma.vmem_to_hbm [thread:$0]  %s76, 256, %s2, [#allocation3], 128, 128, 8
    $region13: #{tpu_custom_call.1} parent=1 // pred_fallthru
      _
    // Predicated region
    $region14: #{tpu_custom_call.1} parent=1 // pred_check
      _
    $region15: #{tpu_custom_call.1} parent=1 // pred_check_branch
      %83 = sbr.rel (0) target = $region17
    $region16: #{tpu_custom_call.1} parent=1 // pred_region
      %84 = dma.done [#allocation3], 256
    $region17: #{tpu_custom_call.1} parent=1 // pred_fallthru
      _
    %85 = vsyncpa [#allocation3], 1

</llo_original>
